<compile_context>
chip_gen: v5e
topology: v5e:2x2
jax: 0.10.0
libtpu: 0.0.40
codegen_flags: <defaults>
</compile_context>

<pallas_src>
import functools

import numpy as np
import jax
import jax.numpy as jnp
from jax.experimental import pallas as pl
from jax.experimental.pallas import tpu as pltpu


def _mha_kernel(v_ref, wp_ref, bp_ref, out_ref, attn_ref, *, inv_temp, d_head):
    # v_ref   : (bb, S, Din)  value block (one batch tile, full seq & channels)
    # wp_ref  : (Din, H)      folded score weights  Wk_h^T q_h  (one column per head)
    # bp_ref  : (1, H)        folded score bias     q_h . b_h
    # out_ref : (bb, 1, Din)  per-head outputs, heads concatenated on the channel axis
    # attn_ref: (bb, S, H)    attention weights
    bb, S, Din = v_ref.shape
    H = wp_ref.shape[1]

    v = v_ref[...].astype(jnp.float32)                            # (bb, S, Din)
    # On v6e/v7x the two matmul operands could be cast to bfloat16 here (HBM/VMEM
    # traffic halves); kept f32 since the test inputs are f32 and softmax is f32.

    # scores[b, s, h] = (v[b,s,:] @ Wp[:,h] + bp[h]) / temperature  -- one wide matmul.
    scores = jax.lax.dot_general(
        v, wp_ref[...].astype(jnp.float32),
        (((2,), (0,)), ((), ())),
        preferred_element_type=jnp.float32)                       # (bb, S, H)
    scores = (scores + bp_ref[...][None]) * inv_temp
    # TODO(synk): pad_mask would be applied here (scores = where(mask, -1000., scores)).

    # Numerically-stable softmax over the sequence axis (axis=1).
    m = jnp.max(scores, axis=1, keepdims=True)                    # (bb, 1, H)
    e = jnp.exp(scores - m)                                       # (bb, S, H)
    denom = jnp.sum(e, axis=1, keepdims=True)                     # (bb, 1, H)
    a = e * (1.0 / denom)                                         # (bb, S, H)
    attn_ref[...] = a.astype(attn_ref.dtype)

    # Expand per-head attention to full channel width with a tiny selection matmul
    # (sel[h, c] = 1 iff channel c belongs to head h), then do the attn @ v
    # contraction on the VPU:  out[b, c] = sum_s a[b, s, head(c)] * v[b, s, c].
    col = jax.lax.broadcasted_iota(jnp.int32, (H, Din), 1)
    row = jax.lax.broadcasted_iota(jnp.int32, (H, Din), 0)
    sel = jnp.where((col >= row * d_head) & (col < (row + 1) * d_head),
                    1.0, 0.0).astype(jnp.float32)                 # (H, Din)
    a_full = jax.lax.dot_general(
        a, sel, (((2,), (0,)), ((), ())),
        preferred_element_type=jnp.float32)                       # (bb, S, Din)
    out = jnp.sum(a_full * v, axis=1, keepdims=True)              # (bb, 1, Din)
    out_ref[...] = out.astype(out_ref.dtype)


def _pick_batch_block(B, S, Din, itemsize, target_bytes=2 << 20):
    """Largest batch tile that (a) keeps the v block <= ~target_bytes (bounded VMEM,
    important on v7x), (b) leaves >=2 grid steps when possible (megacore), and
    (c) divides B evenly."""
    per_batch = max(1, S * Din * itemsize)
    bb = max(1, min(B, target_bytes // per_batch))
    if B >= 2:
        bb = min(bb, pl.cdiv(B, 2))
    bb = int(bb)
    while B % bb:
        bb -= 1
    return bb


def multi_head_attention(v, Q, Wk, bk, *, n_head, d_k):
    """Pallas implementation of MultiHeadAttention.forward (pad_mask=None, eval mode).

    Returns (output, attn) with the PyTorch shapes:
      output: (n_head, B, d_in // n_head),  attn: (n_head, B, seq_len).
    """
    B, S, Din = v.shape
    assert Din % n_head == 0
    Dh = Din // n_head
    temperature = float(np.power(d_k, 0.5))

    # --- parameter folding (tiny one-off einsums in plain JAX, no per-token work) ---
    # scores_h(b,s) = v[b,s] . (Wk_h^T q_h) + q_h . b_h
    wk_h = Wk.reshape(n_head, d_k, Din)                              # (H, Dk, Din)
    wp = jnp.einsum('hkc,hk->ch', wk_h, Q).astype(jnp.float32)       # (Din, H)
    bp = jnp.einsum('hk,hk->h', bk.reshape(n_head, d_k), Q)
    bp = bp.reshape(1, n_head).astype(jnp.float32)                   # (1, H)

    bb = _pick_batch_block(B, S, Din, jnp.dtype(v.dtype).itemsize)
    grid = (B // bb,)

    kernel = functools.partial(_mha_kernel, inv_temp=1.0 / temperature, d_head=Dh)

    out_bd, attn_bsh = pl.pallas_call(
        kernel,
        out_shape=(
            jax.ShapeDtypeStruct((B, 1, Din), v.dtype),
            jax.ShapeDtypeStruct((B, S, n_head), v.dtype),
        ),
        grid_spec=pltpu.PrefetchScalarGridSpec(
            num_scalar_prefetch=0,
            grid=grid,
            in_specs=[
                pl.BlockSpec((bb, S, Din), lambda i: (i, 0, 0)),     # v (streamed once)
                pl.BlockSpec((Din, n_head), lambda i: (0, 0)),       # folded weights
                pl.BlockSpec((1, n_head), lambda i: (0, 0)),         # folded bias
            ],
            out_specs=[
                pl.BlockSpec((bb, 1, Din), lambda i: (i, 0, 0)),     # lane-dense output
                pl.BlockSpec((bb, S, n_head), lambda i: (i, 0, 0)),  # attention weights
            ],
        ),
        compiler_params=pltpu.CompilerParams(
            dimension_semantics=("parallel",)),
    )(v, wp, bp)

    # --- restore the PyTorch return layout (pure layout glue, no compute) ---
    out = out_bd.reshape(B, n_head, Dh).transpose(1, 0, 2)           # (H, B, Dh)
    attn = attn_bsh.transpose(2, 0, 1)                               # (H, B, S)
    return out, attn


def reference_mha(v, Q, Wk, bk, *, n_head, d_k):
    """Pure-JAX reference mirroring the PyTorch forward (eval mode, no mask)."""
    B, S, Din = v.shape
    Dh = Din // n_head
    k = v @ Wk.T + bk                                                # (B, S, H*Dk)
    k = k.reshape(B, S, n_head, d_k).transpose(2, 0, 1, 3)           # (H, B, S, Dk)
    scores = jnp.einsum('hk,hbsk->hbs', Q, k) / np.sqrt(d_k)
    attn = jax.nn.softmax(scores, axis=-1)                           # (H, B, S)
    vh = v.reshape(B, S, n_head, Dh).transpose(2, 0, 1, 3)           # (H, B, S, Dh)
    out = jnp.einsum('hbs,hbsd->hbd', attn, vh)                      # (H, B, Dh)
    return out, attn


if __name__ == "__main__":
    # Small shapes consistent with the module: v is (batch, seq, d_in)
    n_head, d_k, d_in = 4, 8, 32
    sz_b, seq_len = 2, 8

    key = jax.random.PRNGKey(0)
    k_v, k_q, k_w, k_b = jax.random.split(key, 4)

    # Deterministic parameter init (shapes from MultiHeadAttention.__init__)
    Q = jax.random.normal(k_q, (n_head, d_k), jnp.float32) * np.sqrt(2.0 / d_k)
    Wk = jax.random.normal(k_w, (n_head * d_k, d_in), jnp.float32) * np.sqrt(2.0 / d_k)
    bound = 1.0 / np.sqrt(d_in)
    bk = jax.random.uniform(k_b, (n_head * d_k,), jnp.float32, -bound, bound)

    v = jax.random.normal(k_v, (sz_b, seq_len, d_in), jnp.float32)

    out, attn = multi_head_attention(v, Q, Wk, bk, n_head=n_head, d_k=d_k)
    out = jax.block_until_ready(out)
    attn = jax.block_until_ready(attn)

    ref_out, ref_attn = reference_mha(v, Q, Wk, bk, n_head=n_head, d_k=d_k)

    assert out.shape == (n_head, sz_b, d_in // n_head)
    assert attn.shape == (n_head, sz_b, seq_len)
    # q-folding changes fp summation order -> allow ~1e-6-level differences.
    np.testing.assert_allclose(np.asarray(out), np.asarray(ref_out),
                               rtol=2e-5, atol=2e-5)
    np.testing.assert_allclose(np.asarray(attn), np.asarray(ref_attn),
                               rtol=2e-5, atol=2e-5)
    print("KERNEL_OK")
</pallas_src>

<mosaic_0001>
module attributes {stable_mosaic.version = 11 : i64} {
  func.func @_mha_kernel(%arg0: i32, %arg1: memref<1x8x32xf32, #tpu.memory_space<vmem>>, %arg2: memref<32x4xf32, #tpu.memory_space<vmem>>, %arg3: memref<1x4xf32, #tpu.memory_space<vmem>>, %arg4: memref<1x1x32xf32, #tpu.memory_space<vmem>>, %arg5: memref<1x8x4xf32, #tpu.memory_space<vmem>>) attributes {dimension_semantics = [#tpu.dimension_semantics<parallel>], iteration_bounds = array<i64: 2>, scalar_prefetch = 0 : i64, scratch_operands = 0 : i64, tpu.core_type = #tpu.core_type<tc>, window_params = [{transform_indices = @transform_0, window_bounds = array<i64: 1, 8, 32>}, {pipeline_mode = #tpu.pipeline_mode<synchronous>, transform_indices = @transform_1, window_bounds = array<i64: 32, 4>}, {pipeline_mode = #tpu.pipeline_mode<synchronous>, transform_indices = @transform_2, window_bounds = array<i64: 1, 4>}, {transform_indices = @transform_3, window_bounds = array<i64: 1, 1, 32>}, {transform_indices = @transform_4, window_bounds = array<i64: 1, 8, 4>}]} {
    %c0 = arith.constant 0 : index
    %c0_0 = arith.constant 0 : index
    %c0_1 = arith.constant 0 : index
    %0 = vector.load %arg1[%c0, %c0_0, %c0_1] : memref<1x8x32xf32, #tpu.memory_space<vmem>>, vector<1x8x32xf32>
    %c0_2 = arith.constant 0 : index
    %c0_3 = arith.constant 0 : index
    %1 = vector.load %arg2[%c0_2, %c0_3] : memref<32x4xf32, #tpu.memory_space<vmem>>, vector<32x4xf32>
    %cst = arith.constant dense<0.000000e+00> : vector<1x8x4xf32>
    %2 = tpu.matmul %0, %1, %cst {dimension_numbers = #tpu.dot_dimension_numbers<[2], [0], [0, 1], [1], [0, 0, 0, 1, 1, 1], [], []>} : vector<1x8x32xf32>, vector<32x4xf32>, vector<1x8x4xf32> -> vector<1x8x4xf32>
    %c0_4 = arith.constant 0 : index
    %c0_5 = arith.constant 0 : index
    %3 = vector.load %arg3[%c0_4, %c0_5] : memref<1x4xf32, #tpu.memory_space<vmem>>, vector<1x4xf32>
    %4 = vector.shape_cast %3 : vector<1x4xf32> to vector<1x1x4xf32>
    %5 = vector.broadcast %4 : vector<1x1x4xf32> to vector<1x8x4xf32>
    %6 = arith.addf %2, %5 : vector<1x8x4xf32>
    %cst_6 = arith.constant 0.353553385 : f32
    %7 = vector.broadcast %cst_6 : f32 to vector<1x8x4xf32>
    %8 = arith.mulf %6, %7 : vector<1x8x4xf32>
    %cst_7 = arith.constant dense<0xFF800000> : vector<1x4xf32>
    %9 = vector.multi_reduction <maximumf>, %8, %cst_7 [1] : vector<1x8x4xf32> to vector<1x4xf32>
    %10 = vector.shape_cast %9 : vector<1x4xf32> to vector<1x1x4xf32>
    %11 = vector.broadcast %10 : vector<1x1x4xf32> to vector<1x8x4xf32>
    %12 = arith.subf %8, %11 : vector<1x8x4xf32>
    %13 = math.exp %12 : vector<1x8x4xf32>
    %cst_8 = arith.constant dense<0.000000e+00> : vector<1x4xf32>
    %14 = vector.multi_reduction <add>, %13, %cst_8 [1] : vector<1x8x4xf32> to vector<1x4xf32>
    %15 = vector.shape_cast %14 : vector<1x4xf32> to vector<1x1x4xf32>
    %cst_9 = arith.constant 1.000000e+00 : f32
    %16 = vector.broadcast %cst_9 : f32 to vector<1x1x4xf32>
    %17 = arith.divf %16, %15 : vector<1x1x4xf32>
    %18 = vector.broadcast %17 : vector<1x1x4xf32> to vector<1x8x4xf32>
    %19 = arith.mulf %13, %18 : vector<1x8x4xf32>
    %c0_10 = arith.constant 0 : index
    %c0_11 = arith.constant 0 : index
    %c0_12 = arith.constant 0 : index
    %20 = vector.load %arg5[%c0_10, %c0_11, %c0_12] : memref<1x8x4xf32, #tpu.memory_space<vmem>>, vector<1x8x4xf32>
    tpu.vector_store %arg5[%c0_10, %c0_11, %c0_12], %19 {strides = array<i32>} : memref<1x8x4xf32, #tpu.memory_space<vmem>>, vector<1x8x4xf32>,
    %21 = tpu.iota {dimensions = array<i32: 1>} : vector<4x32xi32>
    %22 = tpu.iota {dimensions = array<i32: 0>} : vector<4x32xi32>
    %c8_i32 = arith.constant 8 : i32
    %23 = vector.broadcast %c8_i32 : i32 to vector<4x32xi32>
    %24 = arith.muli %22, %23 : vector<4x32xi32>
    %25 = arith.cmpi sge, %21, %24 : vector<4x32xi32>
    %c1_i32 = arith.constant 1 : i32
    %26 = vector.broadcast %c1_i32 : i32 to vector<4x32xi32>
    %27 = arith.addi %22, %26 : vector<4x32xi32>
    %c8_i32_13 = arith.constant 8 : i32
    %28 = vector.broadcast %c8_i32_13 : i32 to vector<4x32xi32>
    %29 = arith.muli %27, %28 : vector<4x32xi32>
    %30 = arith.cmpi slt, %21, %29 : vector<4x32xi32>
    %31 = arith.andi %25, %30 : vector<4x32xi1>
    %cst_14 = arith.constant 1.000000e+00 : f32
    %cst_15 = arith.constant 0.000000e+00 : f32
    %32 = vector.broadcast %cst_14 : f32 to vector<4x32xf32>
    %33 = vector.broadcast %cst_15 : f32 to vector<4x32xf32>
    %34 = arith.select %31, %32, %33 : vector<4x32xi1>, vector<4x32xf32>
    %cst_16 = arith.constant dense<0.000000e+00> : vector<1x8x32xf32>
    %35 = tpu.matmul %19, %34, %cst_16 {dimension_numbers = #tpu.dot_dimension_numbers<[2], [0], [0, 1], [1], [0, 0, 0, 1, 1, 1], [], []>} : vector<1x8x4xf32>, vector<4x32xf32>, vector<1x8x32xf32> -> vector<1x8x32xf32>
    %36 = arith.mulf %35, %0 : vector<1x8x32xf32>
    %cst_17 = arith.constant dense<0.000000e+00> : vector<1x32xf32>
    %37 = vector.multi_reduction <add>, %36, %cst_17 [1] : vector<1x8x32xf32> to vector<1x32xf32>
    %38 = vector.shape_cast %37 : vector<1x32xf32> to vector<1x1x32xf32>
    %c0_18 = arith.constant 0 : index
    %c0_19 = arith.constant 0 : index
    %c0_20 = arith.constant 0 : index
    %39 = vector.load %arg4[%c0_18, %c0_19, %c0_20] : memref<1x1x32xf32, #tpu.memory_space<vmem>>, vector<1x1x32xf32>
    tpu.vector_store %arg4[%c0_18, %c0_19, %c0_20], %38 {strides = array<i32>} : memref<1x1x32xf32, #tpu.memory_space<vmem>>, vector<1x1x32xf32>,
    return
  }
  func.func @transform_0(%arg0: i32) -> (i32, i32, i32) {
    %c0_i32 = arith.constant 0 : i32
    %c0_i32_0 = arith.constant 0 : i32
    %c0_i32_1 = arith.constant 0 : i32
    return %arg0, %c0_i32, %c0_i32_0 : i32, i32, i32
  }
  func.func @transform_1(%arg0: i32) -> (i32, i32) {
    %c0_i32 = arith.constant 0 : i32
    %c0_i32_0 = arith.constant 0 : i32
    %c0_i32_1 = arith.constant 0 : i32
    return %c0_i32, %c0_i32_0 : i32, i32
  }
  func.func @transform_2(%arg0: i32) -> (i32, i32) {
    %c0_i32 = arith.constant 0 : i32
    %c0_i32_0 = arith.constant 0 : i32
    %c0_i32_1 = arith.constant 0 : i32
    return %c0_i32, %c0_i32_0 : i32, i32
  }
  func.func @transform_3(%arg0: i32) -> (i32, i32, i32) {
    %c0_i32 = arith.constant 0 : i32
    %c0_i32_0 = arith.constant 0 : i32
    %c0_i32_1 = arith.constant 0 : i32
    return %arg0, %c0_i32, %c0_i32_0 : i32, i32, i32
  }
  func.func @transform_4(%arg0: i32) -> (i32, i32, i32) {
    %c0_i32 = arith.constant 0 : i32
    %c0_i32_0 = arith.constant 0 : i32
    %c0_i32_1 = arith.constant 0 : i32
    return %arg0, %c0_i32, %c0_i32_0 : i32, i32, i32
  }
}

</mosaic_0001>

<llo_original>
// kernel: tpu_custom_call.1
$region0: #{tpu_custom_call.1}
  #allocation0 [shape = 'u32[]', space=smem, size = 0x4, offset = 0x4, fixed_abs, tag = 'smem constant byte address 0x4 - core index']
  #allocation1 [shape = 'u32[72,128]{1,0:T(1,128)}', space=vmem, size = 0x9000, scoped, tag = 'internal scratch']
  %s0 = inlined_call_operand.vmem [shape: f32[2,8,32], index: 0, kind: input, shape index: {}]
  %s1 = inlined_call_operand.vmem [shape: f32[32,4], index: 1, kind: input, shape index: {}]
  %s2 = inlined_call_operand.vmem [shape: f32[1,4], index: 2, kind: input, shape index: {}]
  %s3 = inlined_call_operand.hbm [shape: f32[2,1,32], index: 3, kind: output, shape index: {0}]
  %s4 = inlined_call_operand.vmem [shape: f32[2,8,4], index: 4, kind: output, shape index: {1}]
  %5 = xla_tuple %s3, %s4
  %s6 = sld [smem:[#allocation0]]
  $region53: #{tpu_custom_call.1} parent=0
    _
  %s8 = ssub.s32 1, %s6
  %s9 = scalar_select 0, %s8, %s6
  $region1: #{tpu_custom_call.1} parent=0
    #allocation2 [shape = 'u8[1024]{0}', space=vmem, size = 0x400, scoped, tag = 'output window, operand 0']
    #allocation3 [shape = 's32[2]{0}', space=sflag, size = 0x8, scoped, tag = 'scoped memory for tpu_custom_call.1']
    %10 = vsyncpa [#allocation3], 0
    %s11 = scalar_lea.sflag [#allocation3], 1
    %12 = vsyncpa %s11, 0
    loop: start=0, step=1, limit=4
    $region2: #{tpu_custom_call.1} parent=1 // loop_pre_header
      _
    $region3: #{tpu_custom_call.1} parent=1 // loop_header
      %s14 = sphi 0, %s18
      %p15 = scmp.ge.s32.totalorder %s14, 4
      %s24 = sphi 0, %s26
      %s27 = sphi 0, %s24
      %s28 = sphi 0, %s27
      %s44 = sphi 0, %s28
      %s48 = sphi 0, %s48
      %s50 = sphi 0, %s48
      %s51 = sphi 0, %s50
      %s65 = sphi 0, %s51
      %s69 = sphi 0, %s69
      %s71 = sphi 0, %s69
      %s72 = sphi 0, %s71
      %s86 = sphi 0, %s72
      %s92 = sphi 0, %s94
      %s95 = sphi 0, %s92
      %s96 = sphi 0, %s95
      %s112 = sphi 0, %s96
      %s118 = sphi 0, %s120
      %s121 = sphi 0, %s118
      %s122 = sphi 0, %s121
      %s138 = sphi 0, %s122
    $region4: #{tpu_custom_call.1} parent=1 // loop_header_branch
      %17 = sbr.rel (%p15) target = $region8
    $region5: #{tpu_custom_call.1} parent=1 // loop_body
      %s19 = ssub.s32 %s14, 1
      %s20 = ssub.s32 %s14, 2
      %s21 = sadd.s32 %s14, 1
      %s22 = ssub.s32 %s14, %s21
      %p23 = scmp.eq.s32.totalorder %s22, 0
      %s25 = sadd.s32 %s24, 1
      %s26 = scalar_select %p23, %s24, %s25
      %p29 = pneg %p23
      %p30 = scmp.eq.s32.totalorder %s14, 1
      %p31 = por %p29, %p30
      %p32 = scmp.ne.s32.totalorder %s24, %s27
      %p33 = scmp.eq.s32.totalorder %s14, 0
      %p34 = por %p32, %p33
      %p35 = scmp.ne.s32.totalorder %s24, %s27
      %p36 = scmp.eq.s32.totalorder %s19, 1
      %p37 = por %p35, %p36
      %p38 = scmp.ne.s32.totalorder %s27, %s28
      %p39 = scmp.eq.s32.totalorder %s19, 0
      %p40 = por %p38, %p39
      %p41 = scmp.ne.s32.totalorder %s27, %s28
      %p42 = scmp.eq.s32.totalorder %s20, 1
      %p43 = por %p41, %p42
      %p45 = scmp.ne.s32.totalorder %s28, %s44
      %p46 = scmp.eq.s32.totalorder %s20, 0
      %p47 = por %p45, %p46
      %s49 = sadd.s32 %s48, 1
      %p52 = scmp.eq.s32.totalorder %s14, 1
      %p53 = scmp.ne.s32.totalorder %s48, %s50
      %p54 = scmp.eq.s32.totalorder %s14, 0
      %p55 = por %p53, %p54
      %p56 = scmp.ne.s32.totalorder %s48, %s50
      %p57 = scmp.eq.s32.totalorder %s19, 1
      %p58 = por %p56, %p57
      %p59 = scmp.ne.s32.totalorder %s50, %s51
      %p60 = scmp.eq.s32.totalorder %s19, 0
      %p61 = por %p59, %p60
      %p62 = scmp.ne.s32.totalorder %s50, %s51
      %p63 = scmp.eq.s32.totalorder %s20, 1
      %p64 = por %p62, %p63
      %p66 = scmp.ne.s32.totalorder %s51, %s65
      %p67 = scmp.eq.s32.totalorder %s20, 0
      %p68 = por %p66, %p67
      %s70 = sadd.s32 %s69, 1
      %p73 = scmp.eq.s32.totalorder %s14, 1
      %p74 = scmp.ne.s32.totalorder %s69, %s71
      %p75 = scmp.eq.s32.totalorder %s14, 0
      %p76 = por %p74, %p75
      %p77 = scmp.ne.s32.totalorder %s69, %s71
      %p78 = scmp.eq.s32.totalorder %s19, 1
      %p79 = por %p77, %p78
      %p80 = scmp.ne.s32.totalorder %s71, %s72
      %p81 = scmp.eq.s32.totalorder %s19, 0
      %p82 = por %p80, %p81
      %p83 = scmp.ne.s32.totalorder %s71, %s72
      %p84 = scmp.eq.s32.totalorder %s20, 1
      %p85 = por %p83, %p84
      %p87 = scmp.ne.s32.totalorder %s72, %s86
      %p88 = scmp.eq.s32.totalorder %s20, 0
      %p89 = por %p87, %p88
      %s90 = ssub.s32 %s14, %s21
      %p91 = scmp.eq.s32.totalorder %s90, 0
      %s93 = sadd.s32 %s92, 1
      %s94 = scalar_select %p91, %s92, %s93
      %p97 = pneg %p91
      %p98 = scmp.eq.s32.totalorder %s14, 1
      %p99 = por %p97, %p98
      %p100 = scmp.ne.s32.totalorder %s92, %s95
      %p101 = scmp.eq.s32.totalorder %s14, 0
      %p102 = por %p100, %p101
      %p103 = scmp.ne.s32.totalorder %s92, %s95
      %p104 = scmp.eq.s32.totalorder %s19, 1
      %p105 = por %p103, %p104
      %p106 = scmp.ne.s32.totalorder %s95, %s96
      %p107 = scmp.eq.s32.totalorder %s19, 0
      %p108 = por %p106, %p107
      %p109 = scmp.ne.s32.totalorder %s95, %s96
      %p110 = scmp.eq.s32.totalorder %s20, 1
      %p111 = por %p109, %p110
      %p113 = scmp.ne.s32.totalorder %s96, %s112
      %p114 = scmp.eq.s32.totalorder %s20, 0
      %p115 = por %p113, %p114
      %s116 = ssub.s32 %s14, %s21
      %p117 = scmp.eq.s32.totalorder %s116, 0
      %s119 = sadd.s32 %s118, 1
      %s120 = scalar_select %p117, %s118, %s119
      %p123 = pneg %p117
      %p124 = scmp.eq.s32.totalorder %s14, 1
      %p125 = por %p123, %p124
      %p126 = scmp.ne.s32.totalorder %s118, %s121
      %p127 = scmp.eq.s32.totalorder %s14, 0
      %p128 = por %p126, %p127
      %p129 = scmp.ne.s32.totalorder %s118, %s121
      %p130 = scmp.eq.s32.totalorder %s19, 1
      %p131 = por %p129, %p130
      %p132 = scmp.ne.s32.totalorder %s121, %s122
      %p133 = scmp.eq.s32.totalorder %s19, 0
      %p134 = por %p132, %p133
      %p135 = scmp.ne.s32.totalorder %s121, %s122
      %p136 = scmp.eq.s32.totalorder %s20, 1
      %p137 = por %p135, %p136
      %p139 = scmp.ne.s32.totalorder %s122, %s138
      %p140 = scmp.eq.s32.totalorder %s20, 0
      %p141 = por %p139, %p140
      %p142 = scmp.le.s32.totalorder 1, %s14
      %p143 = scmp.lt.s32.totalorder %s14, 3
      %p144 = pnand %p142, %p143
      %p145 = pneg %p144
      // Predicated region
      $region9: #{tpu_custom_call.1} parent=5 // pred_check
        _
      $region10: #{tpu_custom_call.1} parent=5 // pred_check_branch
        %147 = sbr.rel (%p144) target = $region12
      $region11: #{tpu_custom_call.1} parent=5 // pred_region
        %s148 = ssub.s32 %s14, 1
        // Predicated region
        $region13: #{tpu_custom_call.1} parent=11 // pred_check
          %p149 = pneg %p61
        $region14: #{tpu_custom_call.1} parent=11 // pred_check_branch
          %151 = sbr.rel (%p149) target = $region16
        $region15: #{tpu_custom_call.1} parent=11 // pred_region
          _
        $region16: #{tpu_custom_call.1} parent=11 // pred_fallthru
          _
        // Predicated region
        $region17: #{tpu_custom_call.1} parent=11 // pred_check
          %p152 = pneg %p82
        $region18: #{tpu_custom_call.1} parent=11 // pred_check_branch
          %154 = sbr.rel (%p152) target = $region20
        $region19: #{tpu_custom_call.1} parent=11 // pred_region
          _
        $region20: #{tpu_custom_call.1} parent=11 // pred_fallthru
          _
      $region12: #{tpu_custom_call.1} parent=5 // pred_fallthru
        _
      %p155 = scmp.lt.s32.totalorder %s14, 2
      // Predicated region
      $region21: #{tpu_custom_call.1} parent=5 // pred_check
        %p156 = pneg %p155
      $region22: #{tpu_custom_call.1} parent=5 // pred_check_branch
        %158 = sbr.rel (%p156) target = $region24
      $region23: #{tpu_custom_call.1} parent=5 // pred_region
        // Predicated region
        $region25: #{tpu_custom_call.1} parent=23 // pred_check
          %p159 = pneg %p34
        $region26: #{tpu_custom_call.1} parent=23 // pred_check_branch
          %161 = sbr.rel (%p159) target = $region28
        $region27: #{tpu_custom_call.1} parent=23 // pred_region
          %p162 = scmp.lt.s32.totalorder %s14, 1
          %s163 = scalar_select %p162, %s14, 1
          %s164 = smul.addr %s163, 8
          %s165 = scalar_lea.vmem %s0, %s164
        $region28: #{tpu_custom_call.1} parent=23 // pred_fallthru
          _
      $region24: #{tpu_custom_call.1} parent=5 // pred_fallthru
        _
      %p166 = scmp.le.s32.totalorder 1, %s14
      %p167 = scmp.lt.s32.totalorder %s14, 3
      %p168 = pnand %p166, %p167
      %p169 = pneg %p168
      // Predicated region
      $region29: #{tpu_custom_call.1} parent=5 // pred_check
        _
      $region30: #{tpu_custom_call.1} parent=5 // pred_check_branch
        %171 = sbr.rel (%p168) target = $region32
      $region31: #{tpu_custom_call.1} parent=5 // pred_region
        %s172 = ssub.s32 %s14, 1
        %p173 = scmp.lt.s32.totalorder %s19, 1
        %s174 = scalar_select %p173, %s19, 1
        %s175 = smul.addr %s174, 8
        %s176 = scalar_lea.vmem %s0, %s175
        %p177 = pneg %p40
        %p178 = pneg %p37
        %p179 = pneg %p61
        %p180 = pneg %p58
        %p181 = pneg %p82
        %p182 = pneg %p79
        %p183 = pneg %p108
        %p184 = pneg %p105
        %s185 = sand.u32 %s95, 1
        %s186 = scalar_lea.sflag [#allocation3], %s185
        %s187 = sand.u32 %s95, 1
        %s188 = scalar_lea.vmem [#allocation2], %s187
        %p189 = pneg %p134
        %p190 = pneg %p131
        %p191 = scmp.lt.s32.totalorder %s19, 1
        %s192 = scalar_select %p191, %s19, 1
        %s193 = smul.addr %s192, 8
        %s194 = scalar_lea.vmem %s4, %s193
        %p195 = scmp.lt.s32.totalorder %s19, 1
        %s196 = scalar_select %p195, %s19, 1
        %s197 = smul.addr %s196, 8
        %s198 = scalar_lea.vmem %s0, %s197
        %p199 = scmp.lt.s32.totalorder %s19, 1
        %s200 = scalar_select %p199, %s19, 1
        %s201 = smul.addr %s200, 8
        %s202 = scalar_lea.vmem %s4, %s201
        %v203 = vld [vmem:[%s198] sm:$0xff]
        %v204 = vld [vmem:[%s1] sm:$0xff]
        %v205 = vld [vmem:[%s1 + $0x8] sm:$0xff]
        %v206 = vld [vmem:[%s1 + $0x10] sm:$0xff]
        %v207 = vld [vmem:[%s1 + $0x18] sm:$0xff]
        %v208 = vld [vmem:[%s2] sm:$0x1]
        %v210 = vperm.slane %v208, 0
        %vm212 = vcmask 261120
        %v214 = vsel %vm212, %v203, 0
        %216 = vmatpush.msra.mxu0 0.0
        %217 = vmatpush.msra.mxu0 0.0
        %218 = vmatpush.msra.mxu0 0.0
        %219 = vmatpush.msra.mxu0 0.0
        %220 = vmatpush.msra.mxu0 0.0
        %221 = vmatpush.msra.mxu0 0.0
        %222 = vmatpush.msra.mxu0 0.0
        %223 = vmatpush.msra.mxu0 0.0
        %224 = vmatpush.msra.mxu0 0.0
        %225 = vmatpush.msra.mxu0 0.0
        %226 = vmatpush.msra.mxu0 0.0
        %227 = vmatpush.msra.mxu0 0.0
        %228 = vmatpush.msra.mxu0 %v207
        %229 = vmatpush.msra.mxu0 %v206
        %230 = vmatpush.msra.mxu0 %v205
        %231 = vmatpush.msra.mxu0 %v204
        %232 = vmatmul.f32.gmra.mxu0 %v214
        %v233 = vpop.f32.mrf.mxu0
        %v234 = vadd.f32 %v210, %v233
        %235 = vdwg.mxu0
        %v236 = vmul.f32 %v234, 0.35355338
        %vm237 = vcmask 31744
        %v238 = vsel %vm237, %v236, -inf
        %v239 = vrot.slane %v238, 4
        %v240 = vmax.f32 %v238, %v239
        %v241 = vrot.slane %v240, 2
        %v242 = vmax.f32 %v240, %v241
        %v243 = vrot.slane %v242, 1
        %v244 = vmax.f32 %v242, %v243
        %v245 = vsub.f32 %v236, %v244
        %v246 = vmul.f32 %v245, 1.442695
        %v247 = vpow.pop %v246
        %v248 = vsel %vm237, %v247, 0.0
        %v249 = vrot.slane %v248, 4
        %v250 = vadd.f32 %v248, %v249
        %v251 = vrot.slane %v250, 2
        %v252 = vadd.f32 %v250, %v251
        %v253 = vrot.slane %v252, 1
        %v254 = vadd.f32 %v252, %v253
        %v255 = vrcp.pop %v254
        %v256 = vmul.f32 %v254, %v255
        %v257 = vsub.f32 1.0, %v256
        %v258 = vmul.f32 %v255, %v257
        %v259 = vadd.f32 %v255, %v258
        %vm260 = vweird.f32 %v254
        %vm261 = vweird.f32 %v255
        %vm262 = vmor %vm260, %vm261
        %v263 = vsel %vm262, %v255, %v259
        %v264 = vand.u32 2147483647, %v254
        %vm265 = vcmp.eq.f32.partialorder %v264, 8.507059e+37
        %v266 = vand.u32 %v254, 2147483648
        %v267 = vor.u32 1.1754944e-38, %v266
        %v268 = vsel %vm265, %v267, %v263
        %v269 = vmul.f32 1.0, %v268
        %v270 = vmul.f32 %v247, %v269
        %271 = vst.msk [vmem:[%s202] sm:$0xff] %vm237, %v270
        %v272 = vlaneseq
        %v273 = vand.u32 %v272, 127
        %v274 = vlaneseq
        %v275 = vshrl.u32 %v274, 7
        %v276 = vmul.u32 %v275, 8
        %vm277 = vcmp.ge.s32.totalorder %v273, %v276
        %v278 = vadd.s32 %v275, 1
        %v279 = vmul.u32 %v278, 8
        %vm280 = vcmp.lt.s32.totalorder %v273, %v279
        %vm281 = vmand %vm277, %vm280
        %v282 = vsel %vm281, 1.0, 0.0
        %v284 = vsel %vm237, %v270, 0
        %vm286 = vcmask 1043456
        %v288 = vsel %vm286, %v282, 0
        %290 = vmatpush.msra.mxu0 0.0
        %291 = vmatpush.msra.mxu0 0.0
        %292 = vmatpush.msra.mxu0 0.0
        %293 = vmatpush.msra.mxu0 0.0
        %294 = vmatpush.msra.mxu0 0.0
        %295 = vmatpush.msra.mxu0 0.0
        %296 = vmatpush.msra.mxu0 0.0
        %297 = vmatpush.msra.mxu0 0.0
        %298 = vmatpush.msra.mxu0 0.0
        %299 = vmatpush.msra.mxu0 0.0
        %300 = vmatpush.msra.mxu0 0.0
        %301 = vmatpush.msra.mxu0 0.0
        %302 = vmatpush.msra.mxu0 0.0
        %303 = vmatpush.msra.mxu0 0.0
        %304 = vmatpush.msra.mxu0 0.0
        %305 = vmatpush.msra.mxu0 %v288
        %306 = vmatmul.f32.gmra.mxu0 %v284
        %v307 = vpop.f32.mrf.mxu0
        %v308 = vadd.f32 0.0, %v307
        %309 = vdwg.mxu0
        %v310 = vmul.f32 %v308, %v203
        %v311 = vsel %vm212, %v310, 0.0
        %v312 = vrot.slane %v311, 4
        %v313 = vadd.f32 %v311, %v312
        %v314 = vrot.slane %v313, 2
        %v315 = vadd.f32 %v313, %v314
        %v316 = vrot.slane %v315, 1
        %v317 = vadd.f32 %v315, %v316
        %vm318 = vcmask 253952
        %319 = vst.msk [vmem:[%s188] sm:$0x1] %vm318, %v317
        %s320 = sand.u32 %s95, 1
        %s321 = scalar_lea.sflag [#allocation3], %s320
        %s322 = sand.u32 %s95, 1
        %s323 = scalar_lea.vmem [#allocation2], %s322
        %p324 = scmp.lt.s32.totalorder %s19, 1
        %s325 = scalar_select %p324, %s19, 1
        %s326 = smul.addr %s325, 8
        %s327 = scalar_lea.vmem %s4, %s326
        // Predicated region
        $region33: #{tpu_custom_call.1} parent=31 // pred_check
          %p328 = pneg %p105
        $region34: #{tpu_custom_call.1} parent=31 // pred_check_branch
          %330 = sbr.rel (%p328) target = $region36
        $region35: #{tpu_custom_call.1} parent=31 // pred_region
          %332 = vsyncadd %s321, 0
          %s333 = scalar_lea.hbm %s3, %s19
          %s335 = sshll.u32 %s323, 4
          %s336 = int_to_ptr.vmem [resolvable:$true] %s335
          %s337 = sshll.u32 %s333, 4
          %s338 = int_to_ptr.hbm [resolvable:$true] %s337
          %340 = dma.vmem_to_hbm [thread:$0]  %s336, 16, %s338, %s321
        $region36: #{tpu_custom_call.1} parent=31 // pred_fallthru
          _
        // Predicated region
        $region37: #{tpu_custom_call.1} parent=31 // pred_check
          %p341 = pneg %p131
        $region38: #{tpu_custom_call.1} parent=31 // pred_check_branch
          %343 = sbr.rel (%p341) target = $region40
        $region39: #{tpu_custom_call.1} parent=31 // pred_region
          _
        $region40: #{tpu_custom_call.1} parent=31 // pred_fallthru
          _
      $region32: #{tpu_custom_call.1} parent=5 // pred_fallthru
        _
      %p344 = scmp.le.s32.totalorder 2, %s14
      // Predicated region
      $region41: #{tpu_custom_call.1} parent=5 // pred_check
        %p345 = pneg %p344
      $region42: #{tpu_custom_call.1} parent=5 // pred_check_branch
        %347 = sbr.rel (%p345) target = $region44
      $region43: #{tpu_custom_call.1} parent=5 // pred_region
        %s348 = ssub.s32 %s14, 2
        // Predicated region
        $region45: #{tpu_custom_call.1} parent=43 // pred_check
          %p349 = pneg %p111
        $region46: #{tpu_custom_call.1} parent=43 // pred_check_branch
          %351 = sbr.rel (%p349) target = $region48
        $region47: #{tpu_custom_call.1} parent=43 // pred_region
          %s352 = sand.u32 %s96, 1
          %s353 = scalar_lea.sflag [#allocation3], %s352
          %s354 = sand.u32 %s96, 1
          %s355 = scalar_lea.vmem [#allocation2], %s354
          %357 = dma.done %s353, 16
        $region48: #{tpu_custom_call.1} parent=43 // pred_fallthru
          _
        // Predicated region
        $region49: #{tpu_custom_call.1} parent=43 // pred_check
          %p358 = pneg %p137
        $region50: #{tpu_custom_call.1} parent=43 // pred_check_branch
          %360 = sbr.rel (%p358) target = $region52
        $region51: #{tpu_custom_call.1} parent=43 // pred_region
          %p361 = scmp.lt.s32.totalorder %s20, 1
          %s362 = scalar_select %p361, %s20, 1
          %s363 = smul.addr %s362, 8
          %s364 = scalar_lea.vmem %s4, %s363
        $region52: #{tpu_custom_call.1} parent=43 // pred_fallthru
          _
      $region44: #{tpu_custom_call.1} parent=5 // pred_fallthru
        _
    $region6: #{tpu_custom_call.1} parent=1 // loop_footer
      %s18 = sadd.s32 1, %s14
    $region7: #{tpu_custom_call.1} parent=1 // loop_footer_branch
      %13 = sbr.rel target = $region3
    $region8: #{tpu_custom_call.1} parent=1 // loop_exit
      _
    %365 = vsyncpa [#allocation3], 1
    %s366 = scalar_lea.sflag [#allocation3], 1
    %367 = vsyncpa %s366, 1

</llo_original>
